<compile_context>
chip_gen: v7x
topology: tpu7x:2x2x1
jax: 0.10.0
libtpu: 0.0.40
codegen_flags: <defaults>
</compile_context>

<pallas_src>
import functools

import jax
import jax.numpy as jnp
from jax.experimental import pallas as pl
from jax.experimental.pallas import tpu as pltpu


# ----------------------------------------------------------------------------
# Kernel bodies
# ----------------------------------------------------------------------------
def _per_sample_focal(x, t, alpha, gamma):
    """x: (N, C) f32 logits, t: (N, 1) i32 targets -> (N, 1) f32 focal loss."""
    n, c = x.shape
    # numerically-stable log-sum-exp over classes
    m = jnp.max(x, axis=-1, keepdims=True)                       # (N, 1)
    lse = m + jnp.log(jnp.sum(jnp.exp(x - m), axis=-1, keepdims=True))  # (N, 1)
    # target logit via one-hot mask (VPU), no gather / tiny matmul
    cls = jax.lax.broadcasted_iota(jnp.int32, (n, c), 1)         # (N, C)
    tgt_logit = jnp.sum(jnp.where(cls == t, x, 0.0), axis=-1, keepdims=True)  # (N, 1)
    ce = lse - tgt_logit                                         # (N, 1)
    pt = jnp.exp(-ce)
    om = 1.0 - pt
    if gamma == 2.0:       # default: plain multiply, no pow()
        w = om * om
    elif gamma == 1.0:
        w = om
    elif gamma == 0.0:
        w = jnp.ones_like(om)
    else:
        w = jnp.power(om, gamma)
    return alpha * w * ce


def focal_loss_reduce_kernel(alpha, gamma, inv_n, x_ref, t_ref, o_ref):
    """'mean' / 'sum' reductions -> scalar written to SMEM."""
    fl = _per_sample_focal(x_ref[...], t_ref[...], alpha, gamma)
    o_ref[0, 0] = jnp.sum(fl) * inv_n


def focal_loss_none_kernel(alpha, gamma, x_ref, t_ref, o_ref):
    """reduction='none' -> per-sample losses (N, 1) in VMEM."""
    o_ref[...] = _per_sample_focal(x_ref[...], t_ref[...], alpha, gamma)


# ----------------------------------------------------------------------------
# Wrapper
# ----------------------------------------------------------------------------
def focal_loss(logits, targets, alpha=1.0, gamma=2.0, reduction="mean"):
    """logits: (N, C) float, targets: (N,) int  — matches FocalLoss.forward."""
    n, c = logits.shape
    x = logits.astype(jnp.float32)
    t2d = targets.astype(jnp.int32).reshape(n, 1)
    vmem = pl.BlockSpec(memory_space=pltpu.MemorySpace.VMEM)

    # TODO(synk): for very large N, tile over rows with a grid + SMEM accumulator;
    # at the small shapes used here a single resident block is fastest.
    if reduction == "none":
        out = pl.pallas_call(
            functools.partial(focal_loss_none_kernel, float(alpha), float(gamma)),
            out_shape=jax.ShapeDtypeStruct((n, 1), jnp.float32),
            in_specs=[vmem, vmem],
            out_specs=vmem,
        )(x, t2d)
        return out[:, 0]

    inv_n = (1.0 / n) if reduction == "mean" else 1.0
    out = pl.pallas_call(
        functools.partial(focal_loss_reduce_kernel,
                          float(alpha), float(gamma), float(inv_n)),
        out_shape=jax.ShapeDtypeStruct((1, 1), jnp.float32),
        in_specs=[vmem, vmem],
        out_specs=pl.BlockSpec(memory_space=pltpu.MemorySpace.SMEM),
    )(x, t2d)
    return out[0, 0]


# ----------------------------------------------------------------------------
# Pure-JAX reference (for correctness check)
# ----------------------------------------------------------------------------
def reference_focal_loss(logits, targets, alpha=1.0, gamma=2.0, reduction="mean"):
    logp = jax.nn.log_softmax(logits.astype(jnp.float32), axis=-1)
    ce = -jnp.take_along_axis(logp, targets[:, None].astype(jnp.int32), axis=-1)[:, 0]
    pt = jnp.exp(-ce)
    fl = alpha * (1.0 - pt) ** gamma * ce
    if reduction == "mean":
        return fl.mean()
    if reduction == "sum":
        return fl.sum()
    return fl


# ----------------------------------------------------------------------------
# Main
# ----------------------------------------------------------------------------
if __name__ == "__main__":
    N, C = 64, 16
    key = jax.random.PRNGKey(0)
    k1, k2 = jax.random.split(key)
    logits = jax.random.normal(k1, (N, C), jnp.float32) * 2.0
    targets = jax.random.randint(k2, (N,), 0, C, dtype=jnp.int32)

    out_mean = jax.block_until_ready(focal_loss(logits, targets))                      # default: mean
    out_sum = jax.block_until_ready(focal_loss(logits, targets, reduction="sum"))
    out_none = jax.block_until_ready(focal_loss(logits, targets, reduction="none"))

    ref_mean = reference_focal_loss(logits, targets)
    ref_sum = reference_focal_loss(logits, targets, reduction="sum")
    ref_none = reference_focal_loss(logits, targets, reduction="none")

    assert jnp.allclose(out_mean, ref_mean, rtol=1e-4, atol=1e-5), (
        f"mean mismatch: {out_mean} vs {ref_mean}")
    assert jnp.allclose(out_sum, ref_sum, rtol=1e-4, atol=1e-4), (
        f"sum mismatch: {out_sum} vs {ref_sum}")
    assert jnp.allclose(out_none, ref_none, rtol=1e-4, atol=1e-5), (
        f"none mismatch: max abs diff = {jnp.max(jnp.abs(out_none - ref_none))}")

    print("KERNEL_OK")
</pallas_src>

<mosaic_0001>
module attributes {stable_mosaic.version = 11 : i64} {
  func.func @focal_loss_reduce_kernel(%arg0: memref<64x16xf32, #tpu.memory_space<vmem>>, %arg1: memref<64x1xi32, #tpu.memory_space<vmem>>, %arg2: memref<1x1xf32, #tpu.memory_space<smem>>) attributes {dimension_semantics = [], scalar_prefetch = 0 : i64, scratch_operands = 0 : i64, tpu.core_type = #tpu.core_type<tc>} {
    %c0 = arith.constant 0 : index
    %c0_0 = arith.constant 0 : index
    %0 = vector.load %arg0[%c0, %c0_0] : memref<64x16xf32, #tpu.memory_space<vmem>>, vector<64x16xf32>
    %c0_1 = arith.constant 0 : index
    %c0_2 = arith.constant 0 : index
    %1 = vector.load %arg1[%c0_1, %c0_2] : memref<64x1xi32, #tpu.memory_space<vmem>>, vector<64x1xi32>
    %cst = arith.constant dense<0xFF800000> : vector<64xf32>
    %2 = vector.multi_reduction <maximumf>, %0, %cst [1] : vector<64x16xf32> to vector<64xf32>
    %3 = vector.shape_cast %2 : vector<64xf32> to vector<64x1xf32>
    %4 = vector.broadcast %3 : vector<64x1xf32> to vector<64x16xf32>
    %5 = arith.subf %0, %4 : vector<64x16xf32>
    %6 = math.exp %5 : vector<64x16xf32>
    %cst_3 = arith.constant dense<0.000000e+00> : vector<64xf32>
    %7 = vector.multi_reduction <add>, %6, %cst_3 [1] : vector<64x16xf32> to vector<64xf32>
    %8 = vector.shape_cast %7 : vector<64xf32> to vector<64x1xf32>
    %9 = math.log %8 : vector<64x1xf32>
    %10 = arith.addf %3, %9 : vector<64x1xf32>
    %11 = tpu.iota {dimensions = array<i32: 1>} : vector<64x16xi32>
    %12 = vector.broadcast %1 : vector<64x1xi32> to vector<64x16xi32>
    %13 = arith.cmpi eq, %11, %12 : vector<64x16xi32>
    %cst_4 = arith.constant 0.000000e+00 : f32
    %14 = vector.broadcast %cst_4 : f32 to vector<64x16xf32>
    %15 = arith.select %13, %0, %14 : vector<64x16xi1>, vector<64x16xf32>
    %cst_5 = arith.constant dense<0.000000e+00> : vector<64xf32>
    %16 = vector.multi_reduction <add>, %15, %cst_5 [1] : vector<64x16xf32> to vector<64xf32>
    %17 = vector.shape_cast %16 : vector<64xf32> to vector<64x1xf32>
    %18 = arith.subf %10, %17 : vector<64x1xf32>
    %cst_6 = arith.constant 0.000000e+00 : f32
    %19 = vector.broadcast %cst_6 : f32 to vector<64x1xf32>
    %20 = arith.subf %19, %18 : vector<64x1xf32>
    %21 = math.exp %20 : vector<64x1xf32>
    %cst_7 = arith.constant 1.000000e+00 : f32
    %22 = vector.broadcast %cst_7 : f32 to vector<64x1xf32>
    %23 = arith.subf %22, %21 : vector<64x1xf32>
    %24 = arith.mulf %23, %23 : vector<64x1xf32>
    %cst_8 = arith.constant 1.000000e+00 : f32
    %25 = vector.broadcast %cst_8 : f32 to vector<64x1xf32>
    %26 = arith.mulf %25, %24 : vector<64x1xf32>
    %27 = arith.mulf %26, %18 : vector<64x1xf32>
    %28 = vector.shape_cast %27 : vector<64x1xf32> to vector<1x64x1xf32>
    %cst_9 = arith.constant dense<0.000000e+00> : vector<1xf32>
    %29 = vector.multi_reduction <add>, %28, %cst_9 [1, 2] : vector<1x64x1xf32> to vector<1xf32>
    %30 = vector.shape_cast %29 : vector<1xf32> to vector<1x1x1xf32>
    %31 = vector.extract %30[0, 0, 0] : f32 from vector<1x1x1xf32>
    %cst_10 = arith.constant 1.562500e-02 : f32
    %32 = arith.mulf %31, %cst_10 : f32
    %c0_11 = arith.constant 0 : index
    %c0_12 = arith.constant 0 : index
    %33 = memref.load %arg2[%c0_11, %c0_12] : memref<1x1xf32, #tpu.memory_space<smem>>
    memref.store %32, %arg2[%c0_11, %c0_12] : memref<1x1xf32, #tpu.memory_space<smem>>
    return
  }
}

</mosaic_0001>

<llo_original>
// kernel: tpu_custom_call.1
$region0: #{tpu_custom_call.1}
  #allocation0 [shape = 'u32[]', space=smem, size = 0x4, offset = 0x4, fixed_abs, tag = 'smem constant byte address 0x4 - core index']
  #allocation1 [shape = 'u32[144,128]{1,0:T(1,128)}', space=vmem, size = 0x12000, scoped, tag = 'internal scratch']
  %s0 = inlined_call_operand.vmem [shape: f32[64,16], index: 0, kind: input, shape index: {}]
  %s1 = inlined_call_operand.vmem [shape: s32[64,1], index: 1, kind: input, shape index: {}]
  %s2 = inlined_call_operand.hbm [shape: f32[1,1], index: 2, kind: output, shape index: {}]
  %s3 = sld [smem:[#allocation0]]
  $region18: #{tpu_custom_call.1} parent=0
    _
  %s5 = ssub.s32 1, %s3
  %s6 = scalar_select 0, %s5, %s3
  $region1: #{tpu_custom_call.1} parent=0
    #allocation2 [shape = 'u8[512]{0}', space=smem, size = 0x200, scoped, tag = 'output window, operand 0, single buffered']
    #allocation3 [shape = 's32[1]{0}', space=sflag, size = 0x4, scoped, tag = 'scoped memory for tpu_custom_call.1']
    %7 = vsyncpa [#allocation3], 0
    // Predicated region
    $region2: #{tpu_custom_call.1} parent=1 // pred_check
      _
    $region3: #{tpu_custom_call.1} parent=1 // pred_check_branch
      %9 = sbr.rel (0) target = $region5
    $region4: #{tpu_custom_call.1} parent=1 // pred_region
      _
    $region5: #{tpu_custom_call.1} parent=1 // pred_fallthru
      _
    // Predicated region
    $region6: #{tpu_custom_call.1} parent=1 // pred_check
      _
    $region7: #{tpu_custom_call.1} parent=1 // pred_check_branch
      %11 = sbr.rel (0) target = $region9
    $region8: #{tpu_custom_call.1} parent=1 // pred_region
      _
    $region9: #{tpu_custom_call.1} parent=1 // pred_fallthru
      _
    %v12 = vld [vmem:[%s0] sm:$0xff]
    %v13 = vld [vmem:[%s0 + $0x8] sm:$0xff]
    %v14 = vld [vmem:[%s0 + $0x10] sm:$0xff]
    %v15 = vld [vmem:[%s0 + $0x18] sm:$0xff]
    %v16 = vld [vmem:[%s0 + $0x20] sm:$0xff]
    %v17 = vld [vmem:[%s0 + $0x28] sm:$0xff]
    %v18 = vld [vmem:[%s0 + $0x30] sm:$0xff]
    %v19 = vld [vmem:[%s0 + $0x38] sm:$0xff]
    %v20 = vld [vmem:[%s1] sm:$0xff]
    %v21 = vld [vmem:[%s1 + $0x8] sm:$0xff]
    %v22 = vld [vmem:[%s1 + $0x10] sm:$0xff]
    %v23 = vld [vmem:[%s1 + $0x18] sm:$0xff]
    %v24 = vld [vmem:[%s1 + $0x20] sm:$0xff]
    %v25 = vld [vmem:[%s1 + $0x28] sm:$0xff]
    %v26 = vld [vmem:[%s1 + $0x30] sm:$0xff]
    %v27 = vld [vmem:[%s1 + $0x38] sm:$0xff]
    %vm28 = vcmask 130048
    %v29 = vsel %vm28, %v12, -inf
    %30 = vmax.xlane.f32.xlu0 %v29
    %v31 = vpop.xlane.xlu0 %30
    %v32 = vsel %vm28, %v13, -inf
    %33 = vmax.xlane.f32.xlu0 %v32
    %v34 = vpop.xlane.xlu0 %33
    %v35 = vsel %vm28, %v14, -inf
    %36 = vmax.xlane.f32.xlu0 %v35
    %v37 = vpop.xlane.xlu0 %36
    %v38 = vsel %vm28, %v15, -inf
    %39 = vmax.xlane.f32.xlu0 %v38
    %v40 = vpop.xlane.xlu0 %39
    %v41 = vsel %vm28, %v16, -inf
    %42 = vmax.xlane.f32.xlu0 %v41
    %v43 = vpop.xlane.xlu0 %42
    %v44 = vsel %vm28, %v17, -inf
    %45 = vmax.xlane.f32.xlu0 %v44
    %v46 = vpop.xlane.xlu0 %45
    %v47 = vsel %vm28, %v18, -inf
    %48 = vmax.xlane.f32.xlu0 %v47
    %v49 = vpop.xlane.xlu0 %48
    %v50 = vsel %vm28, %v19, -inf
    %51 = vmax.xlane.f32.xlu0 %v50
    %v52 = vpop.xlane.xlu0 %51
    %v53 = vsub.f32 %v12, %v31
    %v54 = vsub.f32 %v13, %v34
    %v55 = vsub.f32 %v14, %v37
    %v56 = vsub.f32 %v15, %v40
    %v57 = vsub.f32 %v16, %v43
    %v58 = vsub.f32 %v17, %v46
    %v59 = vsub.f32 %v18, %v49
    %v60 = vsub.f32 %v19, %v52
    %v61 = vmul.f32 %v53, 1.442695
    %v62 = vpow.pop %v61
    %v63 = vmul.f32 %v54, 1.442695
    %v64 = vpow.pop %v63
    %v65 = vmul.f32 %v55, 1.442695
    %v66 = vpow.pop %v65
    %v67 = vmul.f32 %v56, 1.442695
    %v68 = vpow.pop %v67
    %v69 = vmul.f32 %v57, 1.442695
    %v70 = vpow.pop %v69
    %v71 = vmul.f32 %v58, 1.442695
    %v72 = vpow.pop %v71
    %v73 = vmul.f32 %v59, 1.442695
    %v74 = vpow.pop %v73
    %v75 = vmul.f32 %v60, 1.442695
    %v76 = vpow.pop %v75
    %v77 = vsel %vm28, %v62, 0.0
    %78 = vadd.xlane.f32.xlu0 %v77
    %v79 = vpop.xlane.xlu0 %78
    %v80 = vsel %vm28, %v64, 0.0
    %81 = vadd.xlane.f32.xlu0 %v80
    %v82 = vpop.xlane.xlu0 %81
    %v83 = vsel %vm28, %v66, 0.0
    %84 = vadd.xlane.f32.xlu0 %v83
    %v85 = vpop.xlane.xlu0 %84
    %v86 = vsel %vm28, %v68, 0.0
    %87 = vadd.xlane.f32.xlu0 %v86
    %v88 = vpop.xlane.xlu0 %87
    %v89 = vsel %vm28, %v70, 0.0
    %90 = vadd.xlane.f32.xlu0 %v89
    %v91 = vpop.xlane.xlu0 %90
    %v92 = vsel %vm28, %v72, 0.0
    %93 = vadd.xlane.f32.xlu0 %v92
    %v94 = vpop.xlane.xlu0 %93
    %v95 = vsel %vm28, %v74, 0.0
    %96 = vadd.xlane.f32.xlu0 %v95
    %v97 = vpop.xlane.xlu0 %96
    %v98 = vsel %vm28, %v76, 0.0
    %99 = vadd.xlane.f32.xlu0 %v98
    %v100 = vpop.xlane.xlu0 %99
    %v101 = vlog2.pop %v79
    %v102 = vmul.f32 %v101, 0.6931472
    %v103 = vlog2.pop %v82
    %v104 = vmul.f32 %v103, 0.6931472
    %v105 = vlog2.pop %v85
    %v106 = vmul.f32 %v105, 0.6931472
    %v107 = vlog2.pop %v88
    %v108 = vmul.f32 %v107, 0.6931472
    %v109 = vlog2.pop %v91
    %v110 = vmul.f32 %v109, 0.6931472
    %v111 = vlog2.pop %v94
    %v112 = vmul.f32 %v111, 0.6931472
    %v113 = vlog2.pop %v97
    %v114 = vmul.f32 %v113, 0.6931472
    %v115 = vlog2.pop %v100
    %v116 = vmul.f32 %v115, 0.6931472
    %v117 = vadd.f32 %v31, %v102
    %v118 = vadd.f32 %v34, %v104
    %v119 = vadd.f32 %v37, %v106
    %v120 = vadd.f32 %v40, %v108
    %v121 = vadd.f32 %v43, %v110
    %v122 = vadd.f32 %v46, %v112
    %v123 = vadd.f32 %v49, %v114
    %v124 = vadd.f32 %v52, %v116
    %v125 = vlaneseq
    %v126 = vand.u32 %v125, 127
    %127 = vset.pattern.permute.xlu0 0
    %128 = vperm.xlu0 %127, %v20
    %v129 = vpop.permute.xlu0 %128
    %130 = vset.pattern.permute.xlu0 0
    %131 = vperm.xlu0 %130, %v21
    %v132 = vpop.permute.xlu0 %131
    %133 = vset.pattern.permute.xlu0 0
    %134 = vperm.xlu0 %133, %v22
    %v135 = vpop.permute.xlu0 %134
    %136 = vset.pattern.permute.xlu0 0
    %137 = vperm.xlu0 %136, %v23
    %v138 = vpop.permute.xlu0 %137
    %139 = vset.pattern.permute.xlu0 0
    %140 = vperm.xlu0 %139, %v24
    %v141 = vpop.permute.xlu0 %140
    %142 = vset.pattern.permute.xlu0 0
    %143 = vperm.xlu0 %142, %v25
    %v144 = vpop.permute.xlu0 %143
    %145 = vset.pattern.permute.xlu0 0
    %146 = vperm.xlu0 %145, %v26
    %v147 = vpop.permute.xlu0 %146
    %148 = vset.pattern.permute.xlu0 0
    %149 = vperm.xlu0 %148, %v27
    %v150 = vpop.permute.xlu0 %149
    %vm151 = vcmp.eq.s32.totalorder %v126, %v129
    %vm152 = vcmp.eq.s32.totalorder %v126, %v132
    %vm153 = vcmp.eq.s32.totalorder %v126, %v135
    %vm154 = vcmp.eq.s32.totalorder %v126, %v138
    %vm155 = vcmp.eq.s32.totalorder %v126, %v141
    %vm156 = vcmp.eq.s32.totalorder %v126, %v144
    %vm157 = vcmp.eq.s32.totalorder %v126, %v147
    %vm158 = vcmp.eq.s32.totalorder %v126, %v150
    %v159 = vsel %vm151, %v12, 0.0
    %v160 = vsel %vm152, %v13, 0.0
    %v161 = vsel %vm153, %v14, 0.0
    %v162 = vsel %vm154, %v15, 0.0
    %v163 = vsel %vm155, %v16, 0.0
    %v164 = vsel %vm156, %v17, 0.0
    %v165 = vsel %vm157, %v18, 0.0
    %v166 = vsel %vm158, %v19, 0.0
    %v167 = vsel %vm28, %v159, 0.0
    %168 = vadd.xlane.f32.xlu0 %v167
    %v169 = vpop.xlane.xlu0 %168
    %v170 = vsel %vm28, %v160, 0.0
    %171 = vadd.xlane.f32.xlu0 %v170
    %v172 = vpop.xlane.xlu0 %171
    %v173 = vsel %vm28, %v161, 0.0
    %174 = vadd.xlane.f32.xlu0 %v173
    %v175 = vpop.xlane.xlu0 %174
    %v176 = vsel %vm28, %v162, 0.0
    %177 = vadd.xlane.f32.xlu0 %v176
    %v178 = vpop.xlane.xlu0 %177
    %v179 = vsel %vm28, %v163, 0.0
    %180 = vadd.xlane.f32.xlu0 %v179
    %v181 = vpop.xlane.xlu0 %180
    %v182 = vsel %vm28, %v164, 0.0
    %183 = vadd.xlane.f32.xlu0 %v182
    %v184 = vpop.xlane.xlu0 %183
    %v185 = vsel %vm28, %v165, 0.0
    %186 = vadd.xlane.f32.xlu0 %v185
    %v187 = vpop.xlane.xlu0 %186
    %v188 = vsel %vm28, %v166, 0.0
    %189 = vadd.xlane.f32.xlu0 %v188
    %v190 = vpop.xlane.xlu0 %189
    %v191 = vsub.f32 %v117, %v169
    %v192 = vsub.f32 %v118, %v172
    %v193 = vsub.f32 %v119, %v175
    %v194 = vsub.f32 %v120, %v178
    %v195 = vsub.f32 %v121, %v181
    %v196 = vsub.f32 %v122, %v184
    %v197 = vsub.f32 %v123, %v187
    %v198 = vsub.f32 %v124, %v190
    %v199 = vsub.f32 0.0, %v191
    %v200 = vsub.f32 0.0, %v192
    %v201 = vsub.f32 0.0, %v193
    %v202 = vsub.f32 0.0, %v194
    %v203 = vsub.f32 0.0, %v195
    %v204 = vsub.f32 0.0, %v196
    %v205 = vsub.f32 0.0, %v197
    %v206 = vsub.f32 0.0, %v198
    %v207 = vmul.f32 %v199, 1.442695
    %v208 = vpow.pop %v207
    %v209 = vmul.f32 %v200, 1.442695
    %v210 = vpow.pop %v209
    %v211 = vmul.f32 %v201, 1.442695
    %v212 = vpow.pop %v211
    %v213 = vmul.f32 %v202, 1.442695
    %v214 = vpow.pop %v213
    %v215 = vmul.f32 %v203, 1.442695
    %v216 = vpow.pop %v215
    %v217 = vmul.f32 %v204, 1.442695
    %v218 = vpow.pop %v217
    %v219 = vmul.f32 %v205, 1.442695
    %v220 = vpow.pop %v219
    %v221 = vmul.f32 %v206, 1.442695
    %v222 = vpow.pop %v221
    %v223 = vsub.f32 1.0, %v208
    %v224 = vsub.f32 1.0, %v210
    %v225 = vsub.f32 1.0, %v212
    %v226 = vsub.f32 1.0, %v214
    %v227 = vsub.f32 1.0, %v216
    %v228 = vsub.f32 1.0, %v218
    %v229 = vsub.f32 1.0, %v220
    %v230 = vsub.f32 1.0, %v222
    %v231 = vmul.f32 %v223, %v223
    %v232 = vmul.f32 %v224, %v224
    %v233 = vmul.f32 %v225, %v225
    %v234 = vmul.f32 %v226, %v226
    %v235 = vmul.f32 %v227, %v227
    %v236 = vmul.f32 %v228, %v228
    %v237 = vmul.f32 %v229, %v229
    %v238 = vmul.f32 %v230, %v230
    %v239 = vmul.f32 %v231, %v191
    %v240 = vmul.f32 %v232, %v192
    %v241 = vmul.f32 %v233, %v193
    %v242 = vmul.f32 %v234, %v194
    %v243 = vmul.f32 %v235, %v195
    %v244 = vmul.f32 %v236, %v196
    %v245 = vmul.f32 %v237, %v197
    %v246 = vmul.f32 %v238, %v198
    %vm247 = vcmask 7168
    %v248 = vsel %vm247, %v239, 0.0
    %v249 = vsel %vm247, %v240, 0.0
    %v250 = vadd.f32 %v248, %v249
    %v251 = vsel %vm247, %v241, 0.0
    %v252 = vadd.f32 %v250, %v251
    %v253 = vsel %vm247, %v242, 0.0
    %v254 = vadd.f32 %v252, %v253
    %v255 = vsel %vm247, %v243, 0.0
    %v256 = vadd.f32 %v254, %v255
    %v257 = vsel %vm247, %v244, 0.0
    %v258 = vadd.f32 %v256, %v257
    %v259 = vsel %vm247, %v245, 0.0
    %v260 = vadd.f32 %v258, %v259
    %v261 = vsel %vm247, %v246, 0.0
    %v262 = vadd.f32 %v260, %v261
    %263 = vadd.xlane.f32.xlu0 %v262
    %v264 = vpop.xlane.xlu0 %263
    %v265 = vrot.slane %v264, 4
    %v266 = vadd.f32 %v264, %v265
    %v267 = vrot.slane %v266, 2
    %v268 = vadd.f32 %v266, %v267
    %v269 = vrot.slane %v268, 1
    %v270 = vadd.f32 %v268, %v269
    %s271 = vtos %v270
    %s272 = smul.f32 %s271, 0.015625
    %s273 = scalar_lea.smem [#allocation2], 0
    %274 = sst [smem:[%s273]] %s272
    // Predicated region
    $region10: #{tpu_custom_call.1} parent=1 // pred_check
      _
    $region11: #{tpu_custom_call.1} parent=1 // pred_check_branch
      %276 = sbr.rel (0) target = $region13
    $region12: #{tpu_custom_call.1} parent=1 // pred_region
      %s278 = ssub.s32 16, 16
      %279 = vsyncadd [#allocation3], %s278
      %282 = dma.smem_to_hbm [#allocation2], 16, %s2, [#allocation3]
    $region13: #{tpu_custom_call.1} parent=1 // pred_fallthru
      _
    // Predicated region
    $region14: #{tpu_custom_call.1} parent=1 // pred_check
      _
    $region15: #{tpu_custom_call.1} parent=1 // pred_check_branch
      %284 = sbr.rel (0) target = $region17
    $region16: #{tpu_custom_call.1} parent=1 // pred_region
      %285 = dma.done [#allocation3], 16
    $region17: #{tpu_custom_call.1} parent=1 // pred_fallthru
      _
    %286 = sfence
    %287 = vsyncpa [#allocation3], 1

</llo_original>
